<compile_context>
chip_gen: v7x
topology: tpu7x:2x2x1
jax: 0.10.0
libtpu: 0.0.40
codegen_flags: <defaults>
</compile_context>

<pallas_src>
import functools

import jax
import jax.numpy as jnp
from jax.experimental import pallas as pl
from jax.experimental.pallas import tpu as pltpu

KSIZE = 5   # Conv1d kernel_size
PAD = 2     # Conv1d padding


# ---------------------------------------------------------------------------
# Helpers
# ---------------------------------------------------------------------------
def _round_up(n: int, m: int) -> int:
    return ((n + m - 1) // m) * m


def _vmem_limit_bytes() -> int:
    """Generation-aware scoped-VMEM limit: ~3/4 of physical capacity
    (≈96 MiB on 128-MiB v5e/v6e, ≈48 MiB on 64-MiB v7x)."""
    try:
        cap = int(pltpu.get_tpu_info().vmem_capacity_bytes)
    except Exception:
        cap = 64 * 1024 * 1024
    return min(cap * 3 // 4, 100 * 1024 * 1024)


def _pick_tile(n: int, cands) -> int:
    for t in cands:
        if n % t == 0:
            return t
    return n  # unreachable after padding; kept as a safety fallback


def _row_tile(n: int) -> int:
    # Sublane (row) tile: 256/512-class rows feed the v7x 2x256^2 MXU well,
    # 128 is fine for the v5e 128x128 MXU.
    return _pick_tile(n, (512, 256, 128))


def _col_tile(n: int) -> int:
    # Lane (contraction) tile over adj columns.
    return _pick_tile(n, (1024, 512, 256, 128))


def _fout_tile(f_out: int, tm: int, tk: int, e_in: int, e_res: int,
               e_out: int, budget: int) -> int:
    """Largest F_out tile whose per-step double-buffered footprint fits."""
    cands = []
    for t in (f_out, 1024, 512, 256, 128):
        if t <= f_out and f_out % t == 0 and t not in cands:
            cands.append(t)
    for tn in cands:
        need = (2 * tm * tk * e_in        # adj blocks (double-buffered)
                + 2 * tk * tn * e_in      # support blocks
                + 2 * tm * tn * e_res     # residual blocks
                + 2 * tm * tn * e_out     # output blocks
                + tm * tn * 4)            # f32 accumulator scratch
        if need <= budget:
            return tn
    return 128


# ---------------------------------------------------------------------------
# Pass 1a: support = x @ W   (row-tiled, both branches)
# ---------------------------------------------------------------------------
def _support_kernel(x_ref, w_ref, sup_ref):
    # x_ref: (1, tm, F_in)  w_ref: (F_in, F_out_pad)  sup_ref: (1, tm, F_out_pad)
    sup = jnp.dot(x_ref[0], w_ref[...], preferred_element_type=jnp.float32)
    sup_ref[0] = sup.astype(sup_ref.dtype)


# ---------------------------------------------------------------------------
# Pass 1b: Conv1d(k=5, pad=2) residual over nodes (only when F_in != F_out)
# ---------------------------------------------------------------------------
def _conv_residual_kernel(x_ref, wc_ref, bc_ref, res_ref, acc_ref):
    # x_ref:   (1, N_pad, F_in)          compute dtype
    # wc_ref:  (KSIZE, F_in, F_out_pad)  compute dtype (tap-major)
    # bc_ref:  (1, F_out_pad)            f32 bias
    # res_ref: (1, N_pad, F_out_pad)     compute dtype output
    # acc_ref: (N_pad, F_out_pad)        f32 scratch
    # TODO(synk): for very large N, row-tile this pass with a (tm + 2*PAD)-row
    # halo DMA instead of holding the full (N, F_in) slab per batch (v7x VMEM).
    x = x_ref[0]
    n, f_in = x.shape
    acc_ref[...] = jnp.broadcast_to(bc_ref[...], acc_ref.shape)   # f32 bias init
    xf = x.astype(jnp.float32)        # 32-bit sublane shifts, cast back per tap
    for t in range(KSIZE):
        s = t - PAD                   # residual[r] += x[r + s] @ wc[t]
        if s == 0:
            xs = xf
        elif s > 0:
            xs = jnp.concatenate(
                [xf[s:], jnp.zeros((s, f_in), jnp.float32)], axis=0)
        else:
            xs = jnp.concatenate(
                [jnp.zeros((-s, f_in), jnp.float32), xf[:n + s]], axis=0)
        acc_ref[...] += jnp.dot(xs.astype(x.dtype), wc_ref[t],
                                preferred_element_type=jnp.float32)
    res_ref[0] = acc_ref[...].astype(res_ref.dtype)


# ---------------------------------------------------------------------------
# Pass 2: out = adj @ support + residual, tiled (b, i, j, k), k = reduction
# ---------------------------------------------------------------------------
def _adj_matmul_kernel(adj_ref, sup_ref, res_ref, o_ref, acc_ref, *,
                       tk, sup_resident):
    # adj_ref: (1, tm, tk)
    # sup_ref: (1, N_pad, tn) if sup_resident else (1, tk, tn)
    # res_ref: (1, tm, tn)   (f32 identity residual, or compute-dtype conv res)
    # o_ref:   (1, tm, tn)   acc_ref: (tm, tn) f32 scratch
    k = pl.program_id(3)

    @pl.when(k == 0)
    def _():
        # Initialize accumulator with the residual (saves a zero-fill plus a
        # full (tm, tn) VPU add in the epilogue).
        acc_ref[...] = res_ref[0].astype(jnp.float32)

    if sup_resident:
        start = pl.multiple_of(k * tk, 128)
        sup = sup_ref[0, pl.ds(start, tk), :]
    else:
        sup = sup_ref[0]

    acc_ref[...] += jnp.dot(adj_ref[0], sup, preferred_element_type=jnp.float32)

    @pl.when(k == pl.num_programs(3) - 1)
    def _():
        o_ref[0] = acc_ref[...].astype(o_ref.dtype)


# ---------------------------------------------------------------------------
# Wrapper
# ---------------------------------------------------------------------------
def graph_convolution(x, adj, weight, conv_w=None, conv_b=None,
                      compute_dtype=jnp.bfloat16):
    """GCN forward: adj @ (x @ W) + residual(x). MXU operands fed in
    `compute_dtype` (bf16 default) with f32 accumulation everywhere."""
    B, N, F_in = x.shape
    F_out = weight.shape[1]
    out_dtype = x.dtype
    vmem_limit = _vmem_limit_bytes()

    e_cd = jnp.dtype(compute_dtype).itemsize
    e_out = jnp.dtype(out_dtype).itemsize

    # Pad node and output-feature dims to multiples of 128 (lane-dense stores,
    # (8,128)-aligned tiles). Zero padding is exact: padded adj rows/cols and
    # padded weight/bias columns are zero; the output is sliced back.
    N_pad = _round_up(N, 128)
    F_out_pad = _round_up(F_out, 128)

    xc = x.astype(compute_dtype)
    adjc = adj.astype(compute_dtype)
    if N_pad != N:
        xc = jnp.pad(xc, ((0, 0), (0, N_pad - N), (0, 0)))
        adjc = jnp.pad(adjc, ((0, 0), (0, N_pad - N), (0, N_pad - N)))

    wp = weight
    if F_out_pad != F_out:
        wp = jnp.pad(wp, ((0, 0), (0, F_out_pad - F_out)))
    wc_ = wp.astype(compute_dtype)

    tm = _row_tile(N_pad)
    tk = _col_tile(N_pad)
    ni, nk = N_pad // tm, N_pad // tk

    # -------- Pass 1a: support = x @ W (row-tiled) --------
    support = pl.pallas_call(
        _support_kernel,
        out_shape=jax.ShapeDtypeStruct((B, N_pad, F_out_pad), compute_dtype),
        grid_spec=pltpu.PrefetchScalarGridSpec(
            num_scalar_prefetch=0, grid=(B, ni),
            in_specs=[
                pl.BlockSpec((1, tm, F_in), lambda b, i: (b, i, 0)),
                pl.BlockSpec((F_in, F_out_pad), lambda b, i: (0, 0)),
            ],
            out_specs=pl.BlockSpec((1, tm, F_out_pad), lambda b, i: (b, i, 0)),
        ),
        compiler_params=pltpu.CompilerParams(
            dimension_semantics=("parallel", "parallel"),
            vmem_limit_bytes=vmem_limit),
        cost_estimate=pl.CostEstimate(
            flops=2 * B * N_pad * F_in * F_out_pad,
            transcendentals=0,
            bytes_accessed=(B * N_pad * F_in * e_cd
                            + F_in * F_out_pad * e_cd
                            + B * N_pad * F_out_pad * e_cd)),
    )(xc, wc_)

    # -------- Pass 1b: residual --------
    if F_in == F_out:
        # Identity residual: no extra HBM materialization — pass x (original
        # dtype) straight to Pass 2; the kernel upcasts in-register.
        if N_pad != N or F_out_pad != F_out:
            residual = jnp.pad(x, ((0, 0), (0, N_pad - N), (0, F_out_pad - F_out)))
        else:
            residual = x
    else:
        # Conv1d weight (F_out, F_in, K) -> tap-major (K, F_in, F_out_pad).
        wconv = jnp.transpose(conv_w, (2, 1, 0))
        bconv = conv_b
        if F_out_pad != F_out:
            wconv = jnp.pad(wconv, ((0, 0), (0, 0), (0, F_out_pad - F_out)))
            bconv = jnp.pad(bconv, (0, F_out_pad - F_out))
        wconv = wconv.astype(compute_dtype)
        bconv = bconv.reshape(1, F_out_pad).astype(jnp.float32)

        residual = pl.pallas_call(
            _conv_residual_kernel,
            out_shape=jax.ShapeDtypeStruct((B, N_pad, F_out_pad), compute_dtype),
            grid_spec=pltpu.PrefetchScalarGridSpec(
                num_scalar_prefetch=0, grid=(B,),
                in_specs=[
                    pl.BlockSpec((1, N_pad, F_in), lambda b: (b, 0, 0)),
                    pl.BlockSpec((KSIZE, F_in, F_out_pad), lambda b: (0, 0, 0)),
                    pl.BlockSpec((1, F_out_pad), lambda b: (0, 0)),
                ],
                out_specs=pl.BlockSpec((1, N_pad, F_out_pad), lambda b: (b, 0, 0)),
                scratch_shapes=[pltpu.VMEM((N_pad, F_out_pad), jnp.float32)],
            ),
            compiler_params=pltpu.CompilerParams(
                dimension_semantics=("parallel",),
                vmem_limit_bytes=vmem_limit),
            cost_estimate=pl.CostEstimate(
                flops=2 * KSIZE * B * N_pad * F_in * F_out_pad,
                transcendentals=0,
                bytes_accessed=(B * N_pad * F_in * e_cd
                                + KSIZE * F_in * F_out_pad * e_cd
                                + B * N_pad * F_out_pad * e_cd)),
        )(xc, wconv, bconv)

    e_res = jnp.dtype(residual.dtype).itemsize

    # -------- Pass 2: out = adj @ support + residual --------
    tn = _fout_tile(F_out_pad, tm, tk, e_cd, e_res, e_out,
                    int(vmem_limit * 0.8))
    nj = F_out_pad // tn

    # Keep the whole per-batch support column-slab VMEM-resident when small
    # enough: avoids re-streaming support from HBM ni times per batch.
    sup_resident = ni > 1 and (2 * N_pad * tn * e_cd) <= vmem_limit // 2
    if sup_resident:
        sup_spec = pl.BlockSpec((1, N_pad, tn), lambda b, i, j, k: (b, 0, j))
        sup_reads = 1
    else:
        sup_spec = pl.BlockSpec((1, tk, tn), lambda b, i, j, k: (b, k, j))
        sup_reads = ni

    kernel = functools.partial(_adj_matmul_kernel, tk=tk,
                               sup_resident=sup_resident)

    out = pl.pallas_call(
        kernel,
        out_shape=jax.ShapeDtypeStruct((B, N_pad, F_out_pad), out_dtype),
        grid_spec=pltpu.PrefetchScalarGridSpec(
            num_scalar_prefetch=0, grid=(B, ni, nj, nk),
            in_specs=[
                pl.BlockSpec((1, tm, tk), lambda b, i, j, k: (b, i, k)),
                sup_spec,
                pl.BlockSpec((1, tm, tn), lambda b, i, j, k: (b, i, j)),
            ],
            out_specs=pl.BlockSpec((1, tm, tn), lambda b, i, j, k: (b, i, j)),
            scratch_shapes=[pltpu.VMEM((tm, tn), jnp.float32)],
        ),
        compiler_params=pltpu.CompilerParams(
            dimension_semantics=("parallel", "parallel", "parallel", "arbitrary"),
            vmem_limit_bytes=vmem_limit),
        cost_estimate=pl.CostEstimate(
            flops=2 * B * N_pad * N_pad * F_out_pad,
            transcendentals=0,
            bytes_accessed=(B * N_pad * N_pad * e_cd * nj
                            + B * N_pad * F_out_pad * e_cd * sup_reads
                            + B * N_pad * F_out_pad * e_res
                            + B * N_pad * F_out_pad * e_out)),
    )(adjc, support, residual)

    if N_pad != N or F_out_pad != F_out:
        out = out[:, :N, :F_out]
    return out


# ---------------------------------------------------------------------------
# Pure-JAX reference (mirrors the PyTorch forward and the kernel's rounding
# points when compute_dtype != f32)
# ---------------------------------------------------------------------------
def reference(x, adj, weight, conv_w=None, conv_b=None,
              compute_dtype=jnp.float32):
    f32 = jnp.float32
    hi = jax.lax.Precision.HIGHEST
    rd = lambda a: a.astype(compute_dtype).astype(f32)   # operand rounding
    support = jnp.einsum('bnf,fo->bno', rd(x), rd(weight), precision=hi)
    support = support.astype(compute_dtype).astype(f32)  # stored in compute dtype
    out = jnp.einsum('bmn,bno->bmo', rd(adj), support, precision=hi)
    F_in, F_out = x.shape[-1], weight.shape[1]
    if F_in == F_out:
        return out + x.astype(f32)
    xin = jnp.transpose(rd(x), (0, 2, 1))                 # (B, F_in, N)
    res = jax.lax.conv_general_dilated(
        xin, rd(conv_w), window_strides=(1,), padding=[(PAD, PAD)],
        dimension_numbers=('NCH', 'OIH', 'NCH'),
        precision=hi, preferred_element_type=f32)
    res = res + conv_b.astype(f32)[None, :, None]
    res = jnp.transpose(res, (0, 2, 1))
    res = res.astype(compute_dtype).astype(f32)           # stored in compute dtype
    return out + res


if __name__ == "__main__":
    key = jax.random.PRNGKey(0)
    B, N, F_in, F_out = 2, 8, 16, 32

    k1, k2, k3, k4, k5, k6 = jax.random.split(key, 6)
    x = jax.random.normal(k1, (B, N, F_in), dtype=jnp.float32)
    adj = jax.random.normal(k2, (B, N, N), dtype=jnp.float32)

    # GCN weight: xavier_uniform_ style (deterministic via PRNGKey).
    bound = (6.0 / (F_in + F_out)) ** 0.5
    weight = jax.random.uniform(k3, (F_in, F_out), jnp.float32, -bound, bound)

    # Conv1d residual params (out, in, k).
    cbound = 1.0 / (F_in * KSIZE) ** 0.5
    conv_w = jax.random.uniform(k4, (F_out, F_in, KSIZE), jnp.float32, -cbound, cbound)
    conv_b = jax.random.uniform(k5, (F_out,), jnp.float32, -cbound, cbound)

    sbound = (3.0 / F_in) ** 0.5
    weight_sq = jax.random.uniform(k6, (F_in, F_in), jnp.float32, -sbound, sbound)

    # Case 1: F_in != F_out -> Conv1d residual, bf16 MXU path (default).
    out = jax.block_until_ready(graph_convolution(x, adj, weight, conv_w, conv_b))
    ref = reference(x, adj, weight, conv_w, conv_b, compute_dtype=jnp.bfloat16)
    assert out.shape == (B, N, F_out)
    assert jnp.allclose(out, ref, atol=2e-3, rtol=2e-3), \
        float(jnp.max(jnp.abs(out - ref)))

    # Case 1b: same branch in strict f32 (exact module semantics).
    out_f32 = jax.block_until_ready(
        graph_convolution(x, adj, weight, conv_w, conv_b, compute_dtype=jnp.float32))
    ref_f32 = reference(x, adj, weight, conv_w, conv_b)
    assert jnp.allclose(out_f32, ref_f32, atol=1e-4, rtol=1e-4), \
        float(jnp.max(jnp.abs(out_f32 - ref_f32)))

    # Case 2: F_in == F_out -> identity residual (bf16 and f32 paths).
    out2 = jax.block_until_ready(graph_convolution(x, adj, weight_sq))
    ref2 = reference(x, adj, weight_sq, compute_dtype=jnp.bfloat16)
    assert jnp.allclose(out2, ref2, atol=2e-3, rtol=2e-3), \
        float(jnp.max(jnp.abs(out2 - ref2)))

    out2_f32 = jax.block_until_ready(
        graph_convolution(x, adj, weight_sq, compute_dtype=jnp.float32))
    ref2_f32 = reference(x, adj, weight_sq)
    assert jnp.allclose(out2_f32, ref2_f32, atol=1e-4, rtol=1e-4), \
        float(jnp.max(jnp.abs(out2_f32 - ref2_f32)))

    print("KERNEL_OK")
</pallas_src>

<mosaic_0001>
module attributes {stable_mosaic.version = 11 : i64} {
  func.func @_support_kernel(%arg0: i32, %arg1: i32, %arg2: memref<1x128x16xbf16, #tpu.memory_space<vmem>>, %arg3: memref<16x128xbf16, #tpu.memory_space<vmem>>, %arg4: memref<1x128x128xbf16, #tpu.memory_space<vmem>>) attributes {dimension_semantics = [#tpu.dimension_semantics<parallel>, #tpu.dimension_semantics<parallel>], iteration_bounds = array<i64: 2, 1>, scalar_prefetch = 0 : i64, scratch_operands = 0 : i64, tpu.core_type = #tpu.core_type<tc>, window_params = [{transform_indices = @transform_0, window_bounds = array<i64: 1, 128, 16>}, {pipeline_mode = #tpu.pipeline_mode<synchronous>, transform_indices = @transform_1, window_bounds = array<i64: 16, 128>}, {transform_indices = @transform_2, window_bounds = array<i64: 1, 128, 128>}]} {
    %c0 = arith.constant 0 : index
    %c0_0 = arith.constant 0 : index
    %c0_1 = arith.constant 0 : index
    %0 = vector.load %arg2[%c0, %c0_0, %c0_1] : memref<1x128x16xbf16, #tpu.memory_space<vmem>>, vector<1x128x16xbf16>
    %1 = vector.shape_cast %0 : vector<1x128x16xbf16> to vector<128x16xbf16>
    %c0_2 = arith.constant 0 : index
    %c0_3 = arith.constant 0 : index
    %2 = vector.load %arg3[%c0_2, %c0_3] : memref<16x128xbf16, #tpu.memory_space<vmem>>, vector<16x128xbf16>
    %cst = arith.constant dense<0.000000e+00> : vector<128x128xf32>
    %3 = tpu.matmul %1, %2, %cst {dimension_numbers = #tpu.dot_dimension_numbers<[1], [0], [0], [1], [0, 0, 1, 1], [], []>} : vector<128x16xbf16>, vector<16x128xbf16>, vector<128x128xf32> -> vector<128x128xf32>
    %4 = arith.truncf %3 : vector<128x128xf32> to vector<128x128xbf16>
    %c0_4 = arith.constant 0 : index
    %c0_5 = arith.constant 0 : index
    %c0_6 = arith.constant 0 : index
    %5 = vector.load %arg4[%c0_4, %c0_5, %c0_6] : memref<1x128x128xbf16, #tpu.memory_space<vmem>>, vector<1x128x128xbf16>
    %6 = vector.shape_cast %5 : vector<1x128x128xbf16> to vector<128x128xbf16>
    %7 = vector.shape_cast %4 : vector<128x128xbf16> to vector<1x128x128xbf16>
    tpu.vector_store %arg4[%c0_4, %c0_5, %c0_6], %7 {strides = array<i32>} : memref<1x128x128xbf16, #tpu.memory_space<vmem>>, vector<1x128x128xbf16>,
    return
  }
  func.func @transform_0(%arg0: i32, %arg1: i32) -> (i32, i32, i32) {
    %c0_i32 = arith.constant 0 : i32
    %c0_i32_0 = arith.constant 0 : i32
    return %arg0, %arg1, %c0_i32 : i32, i32, i32
  }
  func.func @transform_1(%arg0: i32, %arg1: i32) -> (i32, i32) {
    %c0_i32 = arith.constant 0 : i32
    %c0_i32_0 = arith.constant 0 : i32
    %c0_i32_1 = arith.constant 0 : i32
    return %c0_i32, %c0_i32_0 : i32, i32
  }
  func.func @transform_2(%arg0: i32, %arg1: i32) -> (i32, i32, i32) {
    %c0_i32 = arith.constant 0 : i32
    %c0_i32_0 = arith.constant 0 : i32
    return %arg0, %arg1, %c0_i32 : i32, i32, i32
  }
}

</mosaic_0001>

<llo_original>
// kernel: tpu_custom_call.1
$region0: #{tpu_custom_call.1}
  #allocation0 [shape = 'u32[]', space=smem, size = 0x4, offset = 0x4, fixed_abs, tag = 'smem constant byte address 0x4 - core index']
  #allocation1 [shape = 'u32[144,128]{1,0:T(1,128)}', space=vmem, size = 0x12000, scoped, tag = 'internal scratch']
  %s0 = inlined_call_operand.vmem [shape: bf16[2,128,16], index: 0, kind: input, shape index: {}]
  %s1 = inlined_call_operand.vmem [shape: bf16[16,128], index: 1, kind: input, shape index: {}]
  %s2 = inlined_call_operand.hbm [shape: bf16[2,128,128], index: 2, kind: output, shape index: {}]
  %s3 = sld [smem:[#allocation0]]
  $region41: #{tpu_custom_call.1} parent=0
    _
  %s5 = ssub.s32 1, %s3
  %s6 = scalar_select 0, %s5, %s3
  $region1: #{tpu_custom_call.1} parent=0
    #allocation2 [shape = 'u8[65536]{0}', space=vmem, size = 0x10000, scoped, tag = 'output window, operand 0']
    #allocation3 [shape = 's32[2]{0}', space=sflag, size = 0x8, scoped, tag = 'scoped memory for tpu_custom_call.1']
    %7 = vsyncpa [#allocation3], 0
    %s8 = scalar_lea.sflag [#allocation3], 1
    %9 = vsyncpa %s8, 0
    loop: start=0, step=1, limit=4
    $region2: #{tpu_custom_call.1} parent=1 // loop_pre_header
      _
    $region3: #{tpu_custom_call.1} parent=1 // loop_header
      %s11 = sphi 0, %s15
      %p12 = scmp.ge.s32.totalorder %s11, 4
      %s18 = sphi 0, %s30
      %s19 = sphi 0, %s26
      %s20 = sphi 0, %s18
      %s21 = sphi 0, %s19
      %s22 = sphi 0, %s20
      %s23 = sphi 0, %s21
      %s35 = sphi 0, %s37
      %s38 = sphi 0, %s35
      %s39 = sphi 0, %s38
      %s55 = sphi 0, %s39
      %s59 = sphi 0, %s59
      %s61 = sphi 0, %s59
      %s62 = sphi 0, %s61
      %s76 = sphi 0, %s62
      %s84 = sphi 0, %s86
      %s87 = sphi 0, %s84
      %s88 = sphi 0, %s87
      %s104 = sphi 0, %s88
    $region4: #{tpu_custom_call.1} parent=1 // loop_header_branch
      %14 = sbr.rel (%p12) target = $region8
    $region5: #{tpu_custom_call.1} parent=1 // loop_body
      %s16 = ssub.s32 %s11, 1
      %s17 = ssub.s32 %s11, 2
      %s24 = sadd.s32 1, %s19
      %p25 = scmp.ge.s32.totalorder %s24, 1
      %s26 = scalar_select %p25, 0, %s24
      %s27 = sadd.s32 1, %s18
      %s28 = scalar_select %p25, %s27, %s18
      %p29 = scmp.ge.s32.totalorder %s28, 2
      %s30 = scalar_select %p29, 0, %s28
      %s31 = ssub.s32 %s18, %s30
      %s32 = ssub.s32 %s19, %s26
      %s33 = sor.u32 %s31, %s32
      %p34 = scmp.eq.s32.totalorder %s33, 0
      %s36 = sadd.s32 %s35, 1
      %s37 = scalar_select %p34, %s35, %s36
      %p40 = pneg %p34
      %p41 = scmp.eq.s32.totalorder %s11, 1
      %p42 = por %p40, %p41
      %p43 = scmp.ne.s32.totalorder %s35, %s38
      %p44 = scmp.eq.s32.totalorder %s11, 0
      %p45 = por %p43, %p44
      %p46 = scmp.ne.s32.totalorder %s35, %s38
      %p47 = scmp.eq.s32.totalorder %s16, 1
      %p48 = por %p46, %p47
      %p49 = scmp.ne.s32.totalorder %s38, %s39
      %p50 = scmp.eq.s32.totalorder %s16, 0
      %p51 = por %p49, %p50
      %p52 = scmp.ne.s32.totalorder %s38, %s39
      %p53 = scmp.eq.s32.totalorder %s17, 1
      %p54 = por %p52, %p53
      %p56 = scmp.ne.s32.totalorder %s39, %s55
      %p57 = scmp.eq.s32.totalorder %s17, 0
      %p58 = por %p56, %p57
      %s60 = sadd.s32 %s59, 1
      %p63 = scmp.eq.s32.totalorder %s11, 1
      %p64 = scmp.ne.s32.totalorder %s59, %s61
      %p65 = scmp.eq.s32.totalorder %s11, 0
      %p66 = por %p64, %p65
      %p67 = scmp.ne.s32.totalorder %s59, %s61
      %p68 = scmp.eq.s32.totalorder %s16, 1
      %p69 = por %p67, %p68
      %p70 = scmp.ne.s32.totalorder %s61, %s62
      %p71 = scmp.eq.s32.totalorder %s16, 0
      %p72 = por %p70, %p71
      %p73 = scmp.ne.s32.totalorder %s61, %s62
      %p74 = scmp.eq.s32.totalorder %s17, 1
      %p75 = por %p73, %p74
      %p77 = scmp.ne.s32.totalorder %s62, %s76
      %p78 = scmp.eq.s32.totalorder %s17, 0
      %p79 = por %p77, %p78
      %s80 = ssub.s32 %s18, %s30
      %s81 = ssub.s32 %s19, %s26
      %s82 = sor.u32 %s80, %s81
      %p83 = scmp.eq.s32.totalorder %s82, 0
      %s85 = sadd.s32 %s84, 1
      %s86 = scalar_select %p83, %s84, %s85
      %p89 = pneg %p83
      %p90 = scmp.eq.s32.totalorder %s11, 1
      %p91 = por %p89, %p90
      %p92 = scmp.ne.s32.totalorder %s84, %s87
      %p93 = scmp.eq.s32.totalorder %s11, 0
      %p94 = por %p92, %p93
      %p95 = scmp.ne.s32.totalorder %s84, %s87
      %p96 = scmp.eq.s32.totalorder %s16, 1
      %p97 = por %p95, %p96
      %p98 = scmp.ne.s32.totalorder %s87, %s88
      %p99 = scmp.eq.s32.totalorder %s16, 0
      %p100 = por %p98, %p99
      %p101 = scmp.ne.s32.totalorder %s87, %s88
      %p102 = scmp.eq.s32.totalorder %s17, 1
      %p103 = por %p101, %p102
      %p105 = scmp.ne.s32.totalorder %s88, %s104
      %p106 = scmp.eq.s32.totalorder %s17, 0
      %p107 = por %p105, %p106
      %p108 = scmp.le.s32.totalorder 1, %s11
      %p109 = scmp.lt.s32.totalorder %s11, 3
      %p110 = pnand %p108, %p109
      %p111 = pneg %p110
      // Predicated region
      $region9: #{tpu_custom_call.1} parent=5 // pred_check
        _
      $region10: #{tpu_custom_call.1} parent=5 // pred_check_branch
        %113 = sbr.rel (%p110) target = $region12
      $region11: #{tpu_custom_call.1} parent=5 // pred_region
        %s114 = ssub.s32 %s11, 1
        // Predicated region
        $region13: #{tpu_custom_call.1} parent=11 // pred_check
          %p115 = pneg %p72
        $region14: #{tpu_custom_call.1} parent=11 // pred_check_branch
          %117 = sbr.rel (%p115) target = $region16
        $region15: #{tpu_custom_call.1} parent=11 // pred_region
          _
        $region16: #{tpu_custom_call.1} parent=11 // pred_fallthru
          _
      $region12: #{tpu_custom_call.1} parent=5 // pred_fallthru
        _
      %p118 = scmp.lt.s32.totalorder %s11, 2
      // Predicated region
      $region17: #{tpu_custom_call.1} parent=5 // pred_check
        %p119 = pneg %p118
      $region18: #{tpu_custom_call.1} parent=5 // pred_check_branch
        %121 = sbr.rel (%p119) target = $region20
      $region19: #{tpu_custom_call.1} parent=5 // pred_region
        // Predicated region
        $region21: #{tpu_custom_call.1} parent=19 // pred_check
          %p122 = pneg %p45
        $region22: #{tpu_custom_call.1} parent=19 // pred_check_branch
          %124 = sbr.rel (%p122) target = $region24
        $region23: #{tpu_custom_call.1} parent=19 // pred_region
          %s125 = smul.u32 16, %s19
          %p126 = scmp.lt.s32.totalorder %s18, 1
          %s127 = scalar_select %p126, %s18, 1
          %p128 = scmp.lt.s32.totalorder %s125, 15
          %s129 = scalar_select %p128, %s125, 15
          %s130 = smul.addr %s127, 16
          %s131 = sadd.s32 %s129, %s130
          %s132 = smul.addr %s131, 4
          %s133 = scalar_lea.vmem %s0, %s132
          %s134 = smul.u32 16, %s19
        $region24: #{tpu_custom_call.1} parent=19 // pred_fallthru
          _
      $region20: #{tpu_custom_call.1} parent=5 // pred_fallthru
        _
      %p135 = scmp.le.s32.totalorder 1, %s11
      %p136 = scmp.lt.s32.totalorder %s11, 3
      %p137 = pnand %p135, %p136
      %p138 = pneg %p137
      // Predicated region
      $region25: #{tpu_custom_call.1} parent=5 // pred_check
        _
      $region26: #{tpu_custom_call.1} parent=5 // pred_check_branch
        %140 = sbr.rel (%p137) target = $region28
      $region27: #{tpu_custom_call.1} parent=5 // pred_region
        %s141 = ssub.s32 %s11, 1
        %s142 = smul.u32 16, %s21
        %p143 = scmp.lt.s32.totalorder %s20, 1
        %s144 = scalar_select %p143, %s20, 1
        %p145 = scmp.lt.s32.totalorder %s142, 15
        %s146 = scalar_select %p145, %s142, 15
        %s147 = smul.addr %s144, 16
        %s148 = sadd.s32 %s146, %s147
        %s149 = smul.addr %s148, 4
        %s150 = scalar_lea.vmem %s0, %s149
        %p151 = pneg %p51
        %p152 = pneg %p48
        %p153 = pneg %p72
        %p154 = pneg %p69
        %p155 = pneg %p100
        %p156 = pneg %p97
        %s157 = sand.u32 %s87, 1
        %s158 = scalar_lea.sflag [#allocation3], %s157
        %s159 = sand.u32 %s87, 1
        %s160 = smul.addr %s159, 64
        %s161 = scalar_lea.vmem [#allocation2], %s160
        %s162 = smul.u32 16, %s21
        %p163 = scmp.lt.s32.totalorder %s20, 1
        %s164 = scalar_select %p163, %s20, 1
        %p165 = scmp.lt.s32.totalorder %s162, 15
        %s166 = scalar_select %p165, %s162, 15
        %s167 = smul.addr %s164, 16
        %s168 = sadd.s32 %s166, %s167
        %s169 = smul.addr %s168, 4
        %s170 = scalar_lea.vmem %s0, %s169
        %s171 = smul.u32 16, %s21
        %s172 = smul.u32 16, %s21
        %v174 = vld [vmem:[%s170] sm:$0xf]
        %v175 = vld [vmem:[%s170 + $0x4] sm:$0xf]
        %v176 = vld [vmem:[%s170 + $0x8] sm:$0xf]
        %v177 = vld [vmem:[%s170 + $0xc] sm:$0xf]
        %v178 = vld [vmem:[%s170 + $0x10] sm:$0xf]
        %v179 = vld [vmem:[%s170 + $0x14] sm:$0xf]
        %v180 = vld [vmem:[%s170 + $0x18] sm:$0xf]
        %v181 = vld [vmem:[%s170 + $0x1c] sm:$0xf]
        %v182 = vld [vmem:[%s170 + $0x20] sm:$0xf]
        %v183 = vld [vmem:[%s170 + $0x24] sm:$0xf]
        %v184 = vld [vmem:[%s170 + $0x28] sm:$0xf]
        %v185 = vld [vmem:[%s170 + $0x2c] sm:$0xf]
        %v186 = vld [vmem:[%s170 + $0x30] sm:$0xf]
        %v187 = vld [vmem:[%s170 + $0x34] sm:$0xf]
        %v188 = vld [vmem:[%s170 + $0x38] sm:$0xf]
        %v189 = vld [vmem:[%s170 + $0x3c] sm:$0xf]
        %v190 = vld [vmem:[%s1] sm:$0xf]
        %v191 = vld [vmem:[%s1 + $0x4] sm:$0xf]
        %v208 = vunpack.c.l.b16 %v174
        %v209 = vunpack.c.l.b16 %v175
        %v210 = vunpack.c.l.b16 %v176
        %v211 = vunpack.c.l.b16 %v177
        %v212 = vunpack.c.l.b16 %v178
        %v213 = vunpack.c.l.b16 %v179
        %v214 = vunpack.c.l.b16 %v180
        %v215 = vunpack.c.l.b16 %v181
        %v216 = vunpack.c.l.b16 %v182
        %v217 = vunpack.c.l.b16 %v183
        %v218 = vunpack.c.l.b16 %v184
        %v219 = vunpack.c.l.b16 %v185
        %v220 = vunpack.c.l.b16 %v186
        %v221 = vunpack.c.l.b16 %v187
        %v222 = vunpack.c.l.b16 %v188
        %v223 = vunpack.c.l.b16 %v189
        %v224 = vpack.c.b16 %v209, %v208
        %v225 = vpack.c.b16 %v211, %v210
        %v226 = vpack.c.b16 %v213, %v212
        %v227 = vpack.c.b16 %v215, %v214
        %v228 = vpack.c.b16 %v217, %v216
        %v229 = vpack.c.b16 %v219, %v218
        %v230 = vpack.c.b16 %v221, %v220
        %v231 = vpack.c.b16 %v223, %v222
        %v234 = vunpack.c.l.b16 %v190
        %v235 = vunpack.c.l.b16 %v191
        %v236 = vpack.c.b16 %v235, %v234
        %vm238 = vcmask 130048
        %v240 = vsel %vm238, %v224, 0
        %v243 = vsel %vm238, %v225, 0
        %v246 = vsel %vm238, %v226, 0
        %v249 = vsel %vm238, %v227, 0
        %v252 = vsel %vm238, %v228, 0
        %v255 = vsel %vm238, %v229, 0
        %v258 = vsel %vm238, %v230, 0
        %v261 = vsel %vm238, %v231, 0
        %263 = vmatprep.subr.bf16.mxu0 0
        %264 = vmatpush1.bf16.msra.mxu0 %v236
        %265 = vmatprep.subr.bf16.mxu0 0
        %266 = vmatpush1.bf16.msra.mxu0 0
        %267 = vmatprep.subr.bf16.mxu0 0
        %268 = vmatpush1.bf16.msra.mxu0 0
        %269 = vmatprep.subr.bf16.mxu0 0
        %270 = vmatpush1.bf16.msra.mxu0 0
        %271 = vmatprep.subr.bf16.mxu0 0
        %272 = vmatpush1.bf16.msra.mxu0 0
        %273 = vmatprep.subr.bf16.mxu0 0
        %274 = vmatpush1.bf16.msra.mxu0 0
        %275 = vmatprep.subr.bf16.mxu0 0
        %276 = vmatpush1.bf16.msra.mxu0 0
        %277 = vmatprep.subr.bf16.mxu0 0
        %278 = vmatpush1.bf16.msra.mxu0 0
        %279 = vmatprep.subr.bf16.mxu0 0
        %280 = vmatpush1.bf16.msra.mxu0 0
        %281 = vmatprep.subr.bf16.mxu0 0
        %282 = vmatpush1.bf16.msra.mxu0 0
        %283 = vmatprep.subr.bf16.mxu0 0
        %284 = vmatpush1.bf16.msra.mxu0 0
        %285 = vmatprep.subr.bf16.mxu0 0
        %286 = vmatpush1.bf16.msra.mxu0 0
        %287 = vmatprep.subr.bf16.mxu0 0
        %288 = vmatpush1.bf16.msra.mxu0 0
        %289 = vmatprep.subr.bf16.mxu0 0
        %290 = vmatpush1.bf16.msra.mxu0 0
        %291 = vmatprep.subr.bf16.mxu0 0
        %292 = vmatpush1.bf16.msra.mxu0 0
        %293 = vmatprep.subr.bf16.mxu0 0
        %294 = vmatpush1.bf16.msra.mxu0 0
        %295 = vmatprep.mubr.bf16.mxu0 0
        %296 = vmatmul.mubr.bf16.gmra.mrb[0].mxu0 %v240
        %v297 = vpop.f32.mrb[0].mxu0
        %v298 = vadd.f32 0.0, %v297
        %v299 = vpop.f32.mrb[0].mxu0
        %v300 = vpop.f32.mrb[0].mxu0
        %v301 = vadd.f32 0.0, %v300
        %v302 = vpop.f32.mrb[0].mxu0
        %303 = vmatprep.mubr.bf16.mxu0 0
        %304 = vmatmul.mubr.bf16.gmra.mrb[0].mxu0 %v243
        %v305 = vpop.f32.mrb[0].mxu0
        %v306 = vadd.f32 0.0, %v305
        %v307 = vpop.f32.mrb[0].mxu0
        %v308 = vpop.f32.mrb[0].mxu0
        %v309 = vadd.f32 0.0, %v308
        %v310 = vpop.f32.mrb[0].mxu0
        %311 = vmatprep.mubr.bf16.mxu0 0
        %312 = vmatmul.mubr.bf16.gmra.mrb[0].mxu0 %v246
        %v313 = vpop.f32.mrb[0].mxu0
        %v314 = vadd.f32 0.0, %v313
        %v315 = vpop.f32.mrb[0].mxu0
        %v316 = vpop.f32.mrb[0].mxu0
        %v317 = vadd.f32 0.0, %v316
        %v318 = vpop.f32.mrb[0].mxu0
        %319 = vmatprep.mubr.bf16.mxu0 0
        %320 = vmatmul.mubr.bf16.gmra.mrb[0].mxu0 %v249
        %v321 = vpop.f32.mrb[0].mxu0
        %v322 = vadd.f32 0.0, %v321
        %v323 = vpop.f32.mrb[0].mxu0
        %v324 = vpop.f32.mrb[0].mxu0
        %v325 = vadd.f32 0.0, %v324
        %v326 = vpop.f32.mrb[0].mxu0
        %327 = vmatprep.mubr.bf16.mxu0 0
        %328 = vmatmul.mubr.bf16.gmra.mrb[0].mxu0 %v252
        %v329 = vpop.f32.mrb[0].mxu0
        %v330 = vadd.f32 0.0, %v329
        %v331 = vpop.f32.mrb[0].mxu0
        %v332 = vpop.f32.mrb[0].mxu0
        %v333 = vadd.f32 0.0, %v332
        %v334 = vpop.f32.mrb[0].mxu0
        %335 = vmatprep.mubr.bf16.mxu0 0
        %336 = vmatmul.mubr.bf16.gmra.mrb[0].mxu0 %v255
        %v337 = vpop.f32.mrb[0].mxu0
        %v338 = vadd.f32 0.0, %v337
        %v339 = vpop.f32.mrb[0].mxu0
        %v340 = vpop.f32.mrb[0].mxu0
        %v341 = vadd.f32 0.0, %v340
        %v342 = vpop.f32.mrb[0].mxu0
        %343 = vmatprep.mubr.bf16.mxu0 0
        %344 = vmatmul.mubr.bf16.gmra.mrb[0].mxu0 %v258
        %v345 = vpop.f32.mrb[0].mxu0
        %v346 = vadd.f32 0.0, %v345
        %v347 = vpop.f32.mrb[0].mxu0
        %v348 = vpop.f32.mrb[0].mxu0
        %v349 = vadd.f32 0.0, %v348
        %v350 = vpop.f32.mrb[0].mxu0
        %351 = vmatprep.mubr.bf16.mxu0 0
        %352 = vmatmul.mubr.bf16.gmra.mrb[0].mxu0 %v261
        %v353 = vpop.f32.mrb[0].mxu0
        %v354 = vadd.f32 0.0, %v353
        %v355 = vpop.f32.mrb[0].mxu0
        %v356 = vpop.f32.mrb[0].mxu0
        %v357 = vadd.f32 0.0, %v356
        %v358 = vpop.f32.mrb[0].mxu0
        %359 = vdwg.mxu0
        %v360 = vpack.c.bf16 %v301, %v298
        %v361 = vpack.c.bf16 %v309, %v306
        %v362 = vpack.c.bf16 %v317, %v314
        %v363 = vpack.c.bf16 %v325, %v322
        %v364 = vpack.c.bf16 %v333, %v330
        %v365 = vpack.c.bf16 %v341, %v338
        %v366 = vpack.c.bf16 %v349, %v346
        %v367 = vpack.c.bf16 %v357, %v354
        %v376 = vunpack.c.l.b16 %v360
        %v377 = vunpack.c.h.b16 %v360
        %v378 = vunpack.c.l.b16 %v361
        %v379 = vunpack.c.h.b16 %v361
        %v380 = vunpack.c.l.b16 %v362
        %v381 = vunpack.c.h.b16 %v362
        %v382 = vunpack.c.l.b16 %v363
        %v383 = vunpack.c.h.b16 %v363
        %v384 = vunpack.c.l.b16 %v364
        %v385 = vunpack.c.h.b16 %v364
        %v386 = vunpack.c.l.b16 %v365
        %v387 = vunpack.c.h.b16 %v365
        %v388 = vunpack.c.l.b16 %v366
        %v389 = vunpack.c.h.b16 %v366
        %v390 = vunpack.c.l.b16 %v367
        %v391 = vunpack.c.h.b16 %v367
        %v392 = vpack.c.b16 %v376, %v376
        %v393 = vpack.c.b16 %v377, %v377
        %v394 = vpack.c.b16 %v378, %v378
        %v395 = vpack.c.b16 %v379, %v379
        %v396 = vpack.c.b16 %v380, %v380
        %v397 = vpack.c.b16 %v381, %v381
        %v398 = vpack.c.b16 %v382, %v382
        %v399 = vpack.c.b16 %v383, %v383
        %v400 = vpack.c.b16 %v384, %v384
        %v401 = vpack.c.b16 %v385, %v385
        %v402 = vpack.c.b16 %v386, %v386
        %v403 = vpack.c.b16 %v387, %v387
        %v404 = vpack.c.b16 %v388, %v388
        %v405 = vpack.c.b16 %v389, %v389
        %v406 = vpack.c.b16 %v390, %v390
        %v407 = vpack.c.b16 %v391, %v391
        %424 = vst [vmem:[%s161] sm:$0xf] %v392
        %425 = vst [vmem:[%s161 + $0x4] sm:$0xf] %v393
        %426 = vst [vmem:[%s161 + $0x8] sm:$0xf] %v394
        %427 = vst [vmem:[%s161 + $0xc] sm:$0xf] %v395
        %428 = vst [vmem:[%s161 + $0x10] sm:$0xf] %v396
        %429 = vst [vmem:[%s161 + $0x14] sm:$0xf] %v397
        %430 = vst [vmem:[%s161 + $0x18] sm:$0xf] %v398
        %431 = vst [vmem:[%s161 + $0x1c] sm:$0xf] %v399
        %432 = vst [vmem:[%s161 + $0x20] sm:$0xf] %v400
        %433 = vst [vmem:[%s161 + $0x24] sm:$0xf] %v401
        %434 = vst [vmem:[%s161 + $0x28] sm:$0xf] %v402
        %435 = vst [vmem:[%s161 + $0x2c] sm:$0xf] %v403
        %436 = vst [vmem:[%s161 + $0x30] sm:$0xf] %v404
        %437 = vst [vmem:[%s161 + $0x34] sm:$0xf] %v405
        %438 = vst [vmem:[%s161 + $0x38] sm:$0xf] %v406
        %439 = vst [vmem:[%s161 + $0x3c] sm:$0xf] %v407
        %s440 = sand.u32 %s87, 1
        %s441 = scalar_lea.sflag [#allocation3], %s440
        %s442 = sand.u32 %s87, 1
        %s443 = smul.addr %s442, 64
        %s444 = scalar_lea.vmem [#allocation2], %s443
        // Predicated region
        $region29: #{tpu_custom_call.1} parent=27 // pred_check
          %p445 = pneg %p97
        $region30: #{tpu_custom_call.1} parent=27 // pred_check_branch
          %447 = sbr.rel (%p445) target = $region32
        $region31: #{tpu_custom_call.1} parent=27 // pred_region
          %s448 = smul.u32 16, %s21
          %s450 = ssub.s32 1024, 1024
          %451 = vsyncadd %s441, %s450
          %s452 = smul.addr %s20, 16
          %s453 = sadd.s32 %s448, %s452
          %s454 = smul.addr %s453, 64
          %s455 = scalar_lea.hbm %s2, %s454
          %s456 = sshll.u32 %s444, 4
          %s457 = int_to_ptr.vmem [resolvable:$true] %s456
          %462 = dma.vmem_to_hbm [thread:$0]  %s457, 1024, %s455, %s441, 64, 64, 4
        $region32: #{tpu_custom_call.1} parent=27 // pred_fallthru
          _
      $region28: #{tpu_custom_call.1} parent=5 // pred_fallthru
        _
      %p463 = scmp.le.s32.totalorder 2, %s11
      // Predicated region
      $region33: #{tpu_custom_call.1} parent=5 // pred_check
        %p464 = pneg %p463
      $region34: #{tpu_custom_call.1} parent=5 // pred_check_branch
        %466 = sbr.rel (%p464) target = $region36
      $region35: #{tpu_custom_call.1} parent=5 // pred_region
        %s467 = ssub.s32 %s11, 2
        // Predicated region
        $region37: #{tpu_custom_call.1} parent=35 // pred_check
          %p468 = pneg %p103
        $region38: #{tpu_custom_call.1} parent=35 // pred_check_branch
          %470 = sbr.rel (%p468) target = $region40
        $region39: #{tpu_custom_call.1} parent=35 // pred_region
          %s471 = sand.u32 %s88, 1
          %s472 = scalar_lea.sflag [#allocation3], %s471
          %s473 = sand.u32 %s88, 1
          %s474 = smul.addr %s473, 64
          %s475 = scalar_lea.vmem [#allocation2], %s474
          %476 = dma.done %s472, 1024
        $region40: #{tpu_custom_call.1} parent=35 // pred_fallthru
          _
      $region36: #{tpu_custom_call.1} parent=5 // pred_fallthru
        _
    $region6: #{tpu_custom_call.1} parent=1 // loop_footer
      %s15 = sadd.s32 1, %s11
    $region7: #{tpu_custom_call.1} parent=1 // loop_footer_branch
      %10 = sbr.rel target = $region3
    $region8: #{tpu_custom_call.1} parent=1 // loop_exit
      _
    %477 = vsyncpa [#allocation3], 1
    %s478 = scalar_lea.sflag [#allocation3], 1
    %479 = vsyncpa %s478, 1

</llo_original>
